<compile_context>
chip_gen: v5e
topology: v5e:2x2
jax: 0.10.0
libtpu: 0.0.40
codegen_flags: <defaults>
</compile_context>

<pallas_src>
import functools

import jax
import jax.numpy as jnp
from jax.experimental import pallas as pl
from jax.experimental.pallas import tpu as pltpu


def centered_linear_kernel(x_ref, dwt_ref, db_ref, o_ref):
    """out = x @ dW_t + db, with dW_t = (W1 - W2).T, db = b1 - b2 (wrapper-side)."""
    y = jnp.dot(x_ref[...], dwt_ref[...], preferred_element_type=jnp.float32)
    o_ref[...] = (y + db_ref[...]).astype(o_ref.dtype)


def centered_model(x, w1, b1, w2, b2, *, block_b=2048, cast_bf16=None,
                   force_pallas=False):
    """forward(x) = (x @ W1.T + b1) - (x @ W2.T + b2), fused."""
    B, D_in = x.shape
    D_out = w1.shape[0]

    # Frozen-model algebraic fusion + one-time transpose (plain XLA, resident).
    dwt = (w1 - w2).T                    # [D_in, D_out]  — MXU-native (K, N)
    db = (b1 - b2).reshape(1, D_out)     # [1, D_out]     — stays f32

    # Tiny problems: custom-call dispatch + DMA prologue dominate; let XLA fuse.
    if not force_pallas and B * D_out < (1 << 14):
        return x @ dwt + db

    # bf16 inputs (f32 accumulate) only pay off when x streaming dominates.
    if cast_bf16 is None:
        cast_bf16 = B >= 4096
    if cast_bf16:
        x_in = x.astype(jnp.bfloat16)
        dwt_in = dwt.astype(jnp.bfloat16)
    else:
        x_in, dwt_in = x, dwt

    # Batch tile: whole batch if small, else block_b rows per grid step.
    tb = B if B <= block_b else block_b
    grid = (pl.cdiv(B, tb),)

    itemsize = jnp.dtype(x_in.dtype).itemsize
    cost = pl.CostEstimate(
        flops=2 * B * D_in * D_out,
        transcendentals=0,
        bytes_accessed=(B * D_in * itemsize            # x
                        + D_in * D_out * itemsize      # dW_t
                        + D_out * 4                    # db
                        + B * D_out * 4),              # out (f32)
    )

    out = pl.pallas_call(
        centered_linear_kernel,
        out_shape=jax.ShapeDtypeStruct((B, D_out), x.dtype),
        grid=grid,
        in_specs=[
            pl.BlockSpec((tb, D_in), lambda i: (i, 0)),      # x tile (streamed)
            pl.BlockSpec((D_in, D_out), lambda i: (0, 0)),   # dW_t (resident)
            pl.BlockSpec((1, D_out), lambda i: (0, 0)),      # db (resident, f32)
        ],
        out_specs=pl.BlockSpec((tb, D_out), lambda i: (i, 0)),
        compiler_params=pltpu.CompilerParams(
            dimension_semantics=("parallel",)),
        cost_estimate=cost,
    )(x_in, dwt_in, db)
    return out


def _reference(x, w1, b1, w2, b2):
    return (x @ w1.T + b1) - (x @ w2.T + b2)


if __name__ == "__main__":
    B, D_in, D_out = 8, 32, 32

    key = jax.random.PRNGKey(0)
    kx, kw, kb, kp = jax.random.split(key, 4)

    # Deterministic params, PyTorch nn.Linear-style uniform init.
    bound = 1.0 / (D_in ** 0.5)
    w1 = jax.random.uniform(kw, (D_out, D_in), jnp.float32, -bound, bound)
    b1 = jax.random.uniform(kb, (D_out,), jnp.float32, -bound, bound)
    # copy.deepcopy(model1) -> model2 starts with identical (frozen) params.
    w2 = w1
    b2 = b1

    x = jax.random.normal(kx, (B, D_in), jnp.float32)

    # Force the Pallas path so the kernel itself is exercised at the test size.
    fn = jax.jit(functools.partial(centered_model, force_pallas=True,
                                   cast_bf16=False))

    # 1) Exact __init__ semantics: identical params => output is exactly zero.
    out0 = jax.block_until_ready(fn(x, w1, b1, w2, b2))
    assert out0.shape == (B, D_out)
    assert bool(jnp.all(out0 == 0.0)), "deepcopy case should be exactly zero"

    # 2) Non-degenerate check (as after training, model1 diverges from frozen model2).
    w1p = w1 + 0.05 * jax.random.normal(kp, (D_out, D_in), jnp.float32)
    out1 = jax.block_until_ready(fn(x, w1p, b1, w2, b2))
    ref1 = _reference(x, w1p, b1, w2, b2)
    assert jnp.allclose(out1, ref1, atol=1e-5, rtol=1e-5), "mismatch vs reference"

    print("KERNEL_OK")
</pallas_src>

<mosaic_0001>
module attributes {stable_mosaic.version = 11 : i64} {
  func.func @centered_linear_kernel(%arg0: i32, %arg1: memref<8x32xf32, #tpu.memory_space<vmem>>, %arg2: memref<32x32xf32, #tpu.memory_space<vmem>>, %arg3: memref<1x32xf32, #tpu.memory_space<vmem>>, %arg4: memref<8x32xf32, #tpu.memory_space<vmem>>) attributes {dimension_semantics = [#tpu.dimension_semantics<parallel>], iteration_bounds = array<i64: 1>, scalar_prefetch = 0 : i64, scratch_operands = 0 : i64, tpu.core_type = #tpu.core_type<tc>, window_params = [{transform_indices = @transform_0, window_bounds = array<i64: 8, 32>}, {pipeline_mode = #tpu.pipeline_mode<synchronous>, transform_indices = @transform_1, window_bounds = array<i64: 32, 32>}, {pipeline_mode = #tpu.pipeline_mode<synchronous>, transform_indices = @transform_2, window_bounds = array<i64: 1, 32>}, {transform_indices = @transform_3, window_bounds = array<i64: 8, 32>}]} {
    %c0 = arith.constant 0 : index
    %c0_0 = arith.constant 0 : index
    %0 = vector.load %arg1[%c0, %c0_0] : memref<8x32xf32, #tpu.memory_space<vmem>>, vector<8x32xf32>
    %c0_1 = arith.constant 0 : index
    %c0_2 = arith.constant 0 : index
    %1 = vector.load %arg2[%c0_1, %c0_2] : memref<32x32xf32, #tpu.memory_space<vmem>>, vector<32x32xf32>
    %cst = arith.constant dense<0.000000e+00> : vector<8x32xf32>
    %2 = tpu.matmul %0, %1, %cst {dimension_numbers = #tpu.dot_dimension_numbers<[1], [0], [0], [1], [0, 0, 1, 1], [], []>} : vector<8x32xf32>, vector<32x32xf32>, vector<8x32xf32> -> vector<8x32xf32>
    %c0_3 = arith.constant 0 : index
    %c0_4 = arith.constant 0 : index
    %3 = vector.load %arg3[%c0_3, %c0_4] : memref<1x32xf32, #tpu.memory_space<vmem>>, vector<1x32xf32>
    %4 = vector.broadcast %3 : vector<1x32xf32> to vector<8x32xf32>
    %5 = arith.addf %2, %4 : vector<8x32xf32>
    %c0_5 = arith.constant 0 : index
    %c0_6 = arith.constant 0 : index
    %6 = vector.load %arg4[%c0_5, %c0_6] : memref<8x32xf32, #tpu.memory_space<vmem>>, vector<8x32xf32>
    tpu.vector_store %arg4[%c0_5, %c0_6], %5 {strides = array<i32>} : memref<8x32xf32, #tpu.memory_space<vmem>>, vector<8x32xf32>,
    return
  }
  func.func @transform_0(%arg0: i32) -> (i32, i32) {
    %c0_i32 = arith.constant 0 : i32
    %c0_i32_0 = arith.constant 0 : i32
    return %arg0, %c0_i32 : i32, i32
  }
  func.func @transform_1(%arg0: i32) -> (i32, i32) {
    %c0_i32 = arith.constant 0 : i32
    %c0_i32_0 = arith.constant 0 : i32
    %c0_i32_1 = arith.constant 0 : i32
    return %c0_i32, %c0_i32_0 : i32, i32
  }
  func.func @transform_2(%arg0: i32) -> (i32, i32) {
    %c0_i32 = arith.constant 0 : i32
    %c0_i32_0 = arith.constant 0 : i32
    %c0_i32_1 = arith.constant 0 : i32
    return %c0_i32, %c0_i32_0 : i32, i32
  }
  func.func @transform_3(%arg0: i32) -> (i32, i32) {
    %c0_i32 = arith.constant 0 : i32
    %c0_i32_0 = arith.constant 0 : i32
    return %arg0, %c0_i32 : i32, i32
  }
}

</mosaic_0001>

<llo_original>
// kernel: centered_model.1
$region0: #{centered_model.1}
  #allocation0 [shape = 'u32[]', space=smem, size = 0x4, offset = 0x4, fixed_abs, tag = 'smem constant byte address 0x4 - core index']
  #allocation1 [shape = 'u32[72,128]{1,0:T(1,128)}', space=vmem, size = 0x9000, scoped, tag = 'internal scratch']
  %s0 = inlined_call_operand.vmem [shape: f32[8,32], index: 0, kind: input, shape index: {}]
  %s1 = inlined_call_operand.vmem [shape: f32[32,32], index: 1, kind: input, shape index: {}]
  %s2 = inlined_call_operand.vmem [shape: f32[1,32], index: 2, kind: input, shape index: {}]
  %s3 = inlined_call_operand.hbm [shape: f32[8,32], index: 3, kind: output, shape index: {}]
  %s4 = sld [smem:[#allocation0]]
  $region22: #{centered_model.1} parent=0
    _
  %s6 = ssub.s32 1, %s4
  %s7 = scalar_select 0, %s6, %s4
  $region1: #{centered_model.1} parent=0
    #allocation2 [shape = 'u8[4096]{0}', space=vmem, size = 0x1000, scoped, tag = 'output window, operand 0, single buffered']
    #allocation3 [shape = 's32[1]{0}', space=sflag, size = 0x4, scoped, tag = 'scoped memory for centered_model.1']
    %8 = vsyncpa [#allocation3], 0
    // Predicated region
    $region2: #{centered_model.1} parent=1 // pred_check
      _
    $region3: #{centered_model.1} parent=1 // pred_check_branch
      %10 = sbr.rel (0) target = $region5
    $region4: #{centered_model.1} parent=1 // pred_region
      _
    $region5: #{centered_model.1} parent=1 // pred_fallthru
      _
    // Predicated region
    $region6: #{centered_model.1} parent=1 // pred_check
      _
    $region7: #{centered_model.1} parent=1 // pred_check_branch
      %12 = sbr.rel (0) target = $region9
    $region8: #{centered_model.1} parent=1 // pred_region
      _
    $region9: #{centered_model.1} parent=1 // pred_fallthru
      _
    // Predicated region
    $region10: #{centered_model.1} parent=1 // pred_check
      _
    $region11: #{centered_model.1} parent=1 // pred_check_branch
      %14 = sbr.rel (0) target = $region13
    $region12: #{centered_model.1} parent=1 // pred_region
      _
    $region13: #{centered_model.1} parent=1 // pred_fallthru
      _
    %v15 = vld [vmem:[%s0] sm:$0xff]
    %v16 = vld [vmem:[%s1] sm:$0xff]
    %v17 = vld [vmem:[%s1 + $0x8] sm:$0xff]
    %v18 = vld [vmem:[%s1 + $0x10] sm:$0xff]
    %v19 = vld [vmem:[%s1 + $0x18] sm:$0xff]
    %v20 = vld [vmem:[%s2] sm:$0x1]
    %v22 = vperm.slane %v20, 0
    %vm24 = vcmask 261120
    %v26 = vsel %vm24, %v15, 0
    %28 = vmatpush.msra.mxu0 0.0
    %29 = vmatpush.msra.mxu0 0.0
    %30 = vmatpush.msra.mxu0 0.0
    %31 = vmatpush.msra.mxu0 0.0
    %32 = vmatpush.msra.mxu0 0.0
    %33 = vmatpush.msra.mxu0 0.0
    %34 = vmatpush.msra.mxu0 0.0
    %35 = vmatpush.msra.mxu0 0.0
    %36 = vmatpush.msra.mxu0 0.0
    %37 = vmatpush.msra.mxu0 0.0
    %38 = vmatpush.msra.mxu0 0.0
    %39 = vmatpush.msra.mxu0 0.0
    %40 = vmatpush.msra.mxu0 %v19
    %41 = vmatpush.msra.mxu0 %v18
    %42 = vmatpush.msra.mxu0 %v17
    %43 = vmatpush.msra.mxu0 %v16
    %44 = vmatmul.f32.gmra.mxu0 %v26
    %v45 = vpop.f32.mrf.mxu0
    %v46 = vadd.f32 %v22, %v45
    %47 = vdwg.mxu0
    %48 = vst.msk [vmem:[#allocation2] sm:$0xff] %vm24, %v46
    // Predicated region
    $region14: #{centered_model.1} parent=1 // pred_check
      _
    $region15: #{centered_model.1} parent=1 // pred_check_branch
      %50 = sbr.rel (0) target = $region17
    $region16: #{centered_model.1} parent=1 // pred_region
      %52 = vsyncadd [#allocation3], 0
      %s54 = sshll.u32 [#allocation2], 4
      %s55 = int_to_ptr.vmem [resolvable:$true] %s54
      %s56 = sshll.u32 %s3, 4
      %s57 = int_to_ptr.hbm [resolvable:$true] %s56
      %59 = dma.vmem_to_hbm [thread:$0]  %s55, 128, %s57, [#allocation3]
    $region17: #{centered_model.1} parent=1 // pred_fallthru
      _
    // Predicated region
    $region18: #{centered_model.1} parent=1 // pred_check
      _
    $region19: #{centered_model.1} parent=1 // pred_check_branch
      %61 = sbr.rel (0) target = $region21
    $region20: #{centered_model.1} parent=1 // pred_region
      %63 = dma.done [#allocation3], 128
    $region21: #{centered_model.1} parent=1 // pred_fallthru
      _
    %64 = vsyncpa [#allocation3], 1

</llo_original>
